<compile_context>
chip_gen: v7x
topology: tpu7x:2x2x1
jax: 0.10.0
libtpu: 0.0.40
codegen_flags: <defaults>
</compile_context>

<pallas_src>
import jax
import jax.numpy as jnp
from jax.experimental import pallas as pl
from jax.experimental.pallas import tpu as pltpu

_VMEM = pl.BlockSpec(memory_space=pltpu.MemorySpace.VMEM)
_LANES = 128  # pack kernel outputs to a multiple of the 128-lane vreg width


def _packed_width(out_features, training):
    n_out = (3 if training else 1) * out_features
    return _LANES * pl.cdiv(n_out, _LANES)


# ----------------------------------------------------------------------------
# Kernels
# ----------------------------------------------------------------------------
def vgae_train_kernel(x_ref, adj_ref, w_hid_ref, w_cat_ref, eps_ref, out_ref):
    """Fused VGAE forward (training): emits packed [mu | logstd | z | 0]."""
    f32 = jnp.float32
    cdt = w_hid_ref.dtype          # MXU operand dtype (bfloat16)
    out_features = eps_ref.shape[1]

    # Layer 1: h = relu(adj @ (x @ W_hid))
    xw = jnp.dot(x_ref[...].astype(cdt), w_hid_ref[...], preferred_element_type=f32)
    h = jnp.maximum(
        jnp.dot(adj_ref[...].astype(cdt), xw.astype(cdt), preferred_element_type=f32),
        0.0)

    # Layer 2 (mu & logstd in one shot): m = adj @ (h @ [W_mu | W_logstd])
    hw = jnp.dot(h.astype(cdt), w_cat_ref[...], preferred_element_type=f32)
    m = jnp.dot(adj_ref[...].astype(cdt), hw.astype(cdt), preferred_element_type=f32)

    mu = m[:, :out_features]
    logstd = m[:, out_features:2 * out_features]

    # Reparameterization epilogue: z = eps * exp(logstd) + mu  (exp on EUP)
    z = eps_ref[...] * jnp.exp(logstd) + mu

    # Packed lane-dense store: m kept intact (no split/re-concat), z inserted.
    out_ref[...] = jnp.zeros_like(out_ref)
    out_ref[:, :2 * out_features] = m.astype(out_ref.dtype)
    out_ref[:, 2 * out_features:3 * out_features] = z.astype(out_ref.dtype)


def vgae_eval_kernel(x_ref, adj_ref, w_hid_ref, w_mu_ref, out_ref):
    """Fused VGAE forward (eval): emits packed [mu | 0]."""
    f32 = jnp.float32
    cdt = w_hid_ref.dtype
    out_features = w_mu_ref.shape[1]

    xw = jnp.dot(x_ref[...].astype(cdt), w_hid_ref[...], preferred_element_type=f32)
    h = jnp.maximum(
        jnp.dot(adj_ref[...].astype(cdt), xw.astype(cdt), preferred_element_type=f32),
        0.0)
    hw = jnp.dot(h.astype(cdt), w_mu_ref[...], preferred_element_type=f32)
    mu = jnp.dot(adj_ref[...].astype(cdt), hw.astype(cdt), preferred_element_type=f32)

    out_ref[...] = jnp.zeros_like(out_ref)
    out_ref[:, :out_features] = mu.astype(out_ref.dtype)


# ----------------------------------------------------------------------------
# Parameter prep (do ONCE, reuse across forward calls)
# ----------------------------------------------------------------------------
def prepare_params(params, compute_dtype=jnp.bfloat16):
    """Pre-cast weights to the MXU dtype and pre-concat [W_mu | W_logstd]."""
    return {
        "w_hid": params["w_hid"].astype(compute_dtype),
        "w_mu": params["w_mu"].astype(compute_dtype),
        "w_cat": jnp.concatenate(
            [params["w_mu"], params["w_logstd"]], axis=1).astype(compute_dtype),
    }


# ----------------------------------------------------------------------------
# Wrapper
# ----------------------------------------------------------------------------
def vgae_forward(x, adj, prepped, eps=None, training=True,
                 compute_dtype=jnp.bfloat16):
    """Matches VGAE.forward semantics (dropout=0.0, bias=False, hids=[32]).

    `prepped` must come from prepare_params() (bf16 weights, cached w_cat).
    x / adj / eps are passed in f32 untouched; all casts happen in-kernel.
    """
    n = adj.shape[0]
    in_features = x.shape[1]
    hid = prepped["w_hid"].shape[1]
    out_features = prepped["w_mu"].shape[1]
    itemsize = jnp.dtype(jnp.float32).itemsize
    w_itemsize = jnp.dtype(compute_dtype).itemsize

    if training:
        if eps is None:
            raise ValueError("training=True requires eps ~ N(0,1) of shape (N, out)")
        width = _packed_width(out_features, training=True)
        cost = pl.CostEstimate(
            flops=int(2 * (n * in_features * hid + n * n * hid
                           + n * hid * 2 * out_features + n * n * 2 * out_features)),
            transcendentals=int(n * out_features),
            bytes_accessed=int(
                (n * in_features + n * n + n * out_features) * itemsize
                + (in_features * hid + hid * 2 * out_features) * w_itemsize
                + n * width * w_itemsize),
        )
        packed = pl.pallas_call(
            vgae_train_kernel,
            out_shape=jax.ShapeDtypeStruct((n, width), compute_dtype),
            in_specs=[_VMEM] * 5,
            out_specs=_VMEM,
            cost_estimate=cost,
        )(x, adj, prepped["w_hid"], prepped["w_cat"], eps.astype(jnp.float32))
        mu = packed[:, :out_features].astype(jnp.float32)
        logstd = packed[:, out_features:2 * out_features].astype(jnp.float32)
        z = packed[:, 2 * out_features:3 * out_features].astype(jnp.float32)
        return z, mu, logstd

    width = _packed_width(out_features, training=False)
    cost = pl.CostEstimate(
        flops=int(2 * (n * in_features * hid + n * n * hid
                       + n * hid * out_features + n * n * out_features)),
        transcendentals=0,
        bytes_accessed=int(
            (n * in_features + n * n) * itemsize
            + (in_features * hid + hid * out_features) * w_itemsize
            + n * width * w_itemsize),
    )
    packed = pl.pallas_call(
        vgae_eval_kernel,
        out_shape=jax.ShapeDtypeStruct((n, width), compute_dtype),
        in_specs=[_VMEM] * 4,
        out_specs=_VMEM,
        cost_estimate=cost,
    )(x, adj, prepped["w_hid"], prepped["w_mu"])
    return packed[:, :out_features].astype(jnp.float32)


# ----------------------------------------------------------------------------
# Deterministic parameter init (Glorot-uniform, like GCNConv default)
# ----------------------------------------------------------------------------
def glorot(key, fan_in, fan_out):
    limit = jnp.sqrt(6.0 / (fan_in + fan_out))
    return jax.random.uniform(
        key, (fan_in, fan_out), dtype=jnp.float32, minval=-limit, maxval=limit
    )


if __name__ == "__main__":
    N = 128          # number of graph nodes
    IN_FEATS = 32    # in_features
    HID = 32         # hids=[32]
    OUT = 16         # out_features=16

    root = jax.random.PRNGKey(0)
    k_x, k_adj, k_w1, k_w2, k_w3, k_eps = jax.random.split(root, 6)

    # Inputs: node features + dense (row-normalized) adjacency.
    x = jax.random.normal(k_x, (N, IN_FEATS), dtype=jnp.float32)
    a = jax.random.uniform(k_adj, (N, N), dtype=jnp.float32)
    a = (a > 0.9).astype(jnp.float32) + jnp.eye(N, dtype=jnp.float32)
    adj = a / jnp.sum(a, axis=1, keepdims=True)

    params = {
        "w_hid": glorot(k_w1, IN_FEATS, HID),
        "w_mu": glorot(k_w2, HID, OUT),
        "w_logstd": glorot(k_w3, HID, OUT),
    }
    eps = jax.random.normal(k_eps, (N, OUT), dtype=jnp.float32)

    # One-time parameter prep (bf16 casts + w_cat concat hoisted out of forward).
    prepped = jax.tree_util.tree_map(jax.block_until_ready, prepare_params(params))

    # Training-mode forward (PyTorch default training=True): returns (z, mu, logstd).
    z, mu, logstd = vgae_forward(x, adj, prepped, eps, training=True)
    jax.block_until_ready((z, mu, logstd))

    f32, bf = jnp.float32, jnp.bfloat16
    dotf = lambda a, b: jnp.dot(a, b, precision=jax.lax.Precision.HIGHEST)

    # Reference 1 (tight): emulate the kernel's bf16-operand / f32-accum /
    # bf16-output path.
    xe = x.astype(bf).astype(f32)
    adje = adj.astype(bf).astype(f32)
    whe = params["w_hid"].astype(bf).astype(f32)
    wce = jnp.concatenate([params["w_mu"], params["w_logstd"]], 1).astype(bf).astype(f32)
    xw_e = dotf(xe, whe).astype(bf).astype(f32)
    h_e = jnp.maximum(dotf(adje, xw_e), 0.0).astype(bf).astype(f32)
    hw_e = dotf(h_e, wce).astype(bf).astype(f32)
    m_e = dotf(adje, hw_e)
    mu_e, logstd_e = m_e[:, :OUT], m_e[:, OUT:]
    z_e = eps * jnp.exp(logstd_e) + mu_e
    mu_e = mu_e.astype(bf).astype(f32)
    logstd_e = logstd_e.astype(bf).astype(f32)
    z_e = z_e.astype(bf).astype(f32)
    assert jnp.allclose(mu, mu_e, atol=1e-2, rtol=2e-2), float(jnp.max(jnp.abs(mu - mu_e)))
    assert jnp.allclose(logstd, logstd_e, atol=1e-2, rtol=2e-2), float(jnp.max(jnp.abs(logstd - logstd_e)))
    assert jnp.allclose(z, z_e, atol=2e-2, rtol=2e-2), float(jnp.max(jnp.abs(z - z_e)))

    # Reference 2 (loose sanity): full-precision f32 math matches module semantics.
    h_ref = jnp.maximum(dotf(adj, dotf(x, params["w_hid"])), 0.0)
    mu_ref = dotf(adj, dotf(h_ref, params["w_mu"]))
    logstd_ref = dotf(adj, dotf(h_ref, params["w_logstd"]))
    z_ref = eps * jnp.exp(logstd_ref) + mu_ref
    assert jnp.allclose(mu, mu_ref, atol=5e-2, rtol=1e-1), float(jnp.max(jnp.abs(mu - mu_ref)))
    assert jnp.allclose(logstd, logstd_ref, atol=5e-2, rtol=1e-1), float(jnp.max(jnp.abs(logstd - logstd_ref)))
    assert jnp.allclose(z, z_ref, atol=5e-2, rtol=1e-1), float(jnp.max(jnp.abs(z - z_ref)))

    # Eval-mode forward returns mu only (no eps needed).
    mu_eval = vgae_forward(x, adj, prepped, training=False)
    jax.block_until_ready(mu_eval)
    assert jnp.allclose(mu_eval, mu, atol=1e-3, rtol=1e-3), float(jnp.max(jnp.abs(mu_eval - mu)))

    # TODO(synk): InnerProductDecoder is constructed but never used in forward();
    # not implemented here.
    print("KERNEL_OK")
</pallas_src>

<mosaic_0001>
module attributes {stable_mosaic.version = 11 : i64} {
  func.func @vgae_train_kernel(%arg0: memref<128x32xf32, #tpu.memory_space<vmem>>, %arg1: memref<128x128xf32, #tpu.memory_space<vmem>>, %arg2: memref<32x32xbf16, #tpu.memory_space<vmem>>, %arg3: memref<32x32xbf16, #tpu.memory_space<vmem>>, %arg4: memref<128x16xf32, #tpu.memory_space<vmem>>, %arg5: memref<128x128xbf16, #tpu.memory_space<vmem>>) attributes {dimension_semantics = [], scalar_prefetch = 0 : i64, scratch_operands = 0 : i64, tpu.core_type = #tpu.core_type<tc>} {
    %c0 = arith.constant 0 : index
    %c0_0 = arith.constant 0 : index
    %0 = vector.load %arg0[%c0, %c0_0] : memref<128x32xf32, #tpu.memory_space<vmem>>, vector<128x32xf32>
    %1 = arith.truncf %0 : vector<128x32xf32> to vector<128x32xbf16>
    %c0_1 = arith.constant 0 : index
    %c0_2 = arith.constant 0 : index
    %2 = vector.load %arg2[%c0_1, %c0_2] : memref<32x32xbf16, #tpu.memory_space<vmem>>, vector<32x32xbf16>
    %cst = arith.constant dense<0.000000e+00> : vector<128x32xf32>
    %3 = tpu.matmul %1, %2, %cst {dimension_numbers = #tpu.dot_dimension_numbers<[1], [0], [0], [1], [0, 0, 1, 1], [], []>} : vector<128x32xbf16>, vector<32x32xbf16>, vector<128x32xf32> -> vector<128x32xf32>
    %c0_3 = arith.constant 0 : index
    %c0_4 = arith.constant 0 : index
    %4 = vector.load %arg1[%c0_3, %c0_4] : memref<128x128xf32, #tpu.memory_space<vmem>>, vector<128x128xf32>
    %5 = arith.truncf %4 : vector<128x128xf32> to vector<128x128xbf16>
    %6 = arith.truncf %3 : vector<128x32xf32> to vector<128x32xbf16>
    %cst_5 = arith.constant dense<0.000000e+00> : vector<128x32xf32>
    %7 = tpu.matmul %5, %6, %cst_5 {dimension_numbers = #tpu.dot_dimension_numbers<[1], [0], [0], [1], [0, 0, 1, 1], [], []>} : vector<128x128xbf16>, vector<128x32xbf16>, vector<128x32xf32> -> vector<128x32xf32>
    %cst_6 = arith.constant 0.000000e+00 : f32
    %8 = vector.broadcast %cst_6 : f32 to vector<128x32xf32>
    %9 = arith.maximumf %7, %8 : vector<128x32xf32>
    %10 = arith.truncf %9 : vector<128x32xf32> to vector<128x32xbf16>
    %c0_7 = arith.constant 0 : index
    %c0_8 = arith.constant 0 : index
    %11 = vector.load %arg3[%c0_7, %c0_8] : memref<32x32xbf16, #tpu.memory_space<vmem>>, vector<32x32xbf16>
    %cst_9 = arith.constant dense<0.000000e+00> : vector<128x32xf32>
    %12 = tpu.matmul %10, %11, %cst_9 {dimension_numbers = #tpu.dot_dimension_numbers<[1], [0], [0], [1], [0, 0, 1, 1], [], []>} : vector<128x32xbf16>, vector<32x32xbf16>, vector<128x32xf32> -> vector<128x32xf32>
    %c0_10 = arith.constant 0 : index
    %c0_11 = arith.constant 0 : index
    %13 = vector.load %arg1[%c0_10, %c0_11] : memref<128x128xf32, #tpu.memory_space<vmem>>, vector<128x128xf32>
    %14 = arith.truncf %13 : vector<128x128xf32> to vector<128x128xbf16>
    %15 = arith.truncf %12 : vector<128x32xf32> to vector<128x32xbf16>
    %cst_12 = arith.constant dense<0.000000e+00> : vector<128x32xf32>
    %16 = tpu.matmul %14, %15, %cst_12 {dimension_numbers = #tpu.dot_dimension_numbers<[1], [0], [0], [1], [0, 0, 1, 1], [], []>} : vector<128x128xbf16>, vector<128x32xbf16>, vector<128x32xf32> -> vector<128x32xf32>
    %17 = vector.extract_strided_slice %16 {offsets = [0, 0], sizes = [128, 16], strides = [1, 1]} : vector<128x32xf32> to vector<128x16xf32>
    %18 = vector.extract_strided_slice %16 {offsets = [0, 16], sizes = [128, 16], strides = [1, 1]} : vector<128x32xf32> to vector<128x16xf32>
    %c0_13 = arith.constant 0 : index
    %c0_14 = arith.constant 0 : index
    %19 = vector.load %arg4[%c0_13, %c0_14] : memref<128x16xf32, #tpu.memory_space<vmem>>, vector<128x16xf32>
    %20 = math.exp %18 : vector<128x16xf32>
    %21 = arith.mulf %19, %20 : vector<128x16xf32>
    %22 = arith.addf %21, %17 : vector<128x16xf32>
    %cst_15 = arith.constant 0.000000e+00 : bf16
    %23 = vector.broadcast %cst_15 : bf16 to vector<128x128xbf16>
    %c0_16 = arith.constant 0 : index
    %c0_17 = arith.constant 0 : index
    %24 = vector.load %arg5[%c0_16, %c0_17] : memref<128x128xbf16, #tpu.memory_space<vmem>>, vector<128x128xbf16>
    tpu.vector_store %arg5[%c0_16, %c0_17], %23 {strides = array<i32>} : memref<128x128xbf16, #tpu.memory_space<vmem>>, vector<128x128xbf16>,
    %25 = arith.truncf %16 : vector<128x32xf32> to vector<128x32xbf16>
    %c0_18 = arith.constant 0 : index
    %c0_19 = arith.constant 0 : index
    %26 = vector.load %arg5[%c0_18, %c0_19] : memref<128x128xbf16, #tpu.memory_space<vmem>>, vector<128x32xbf16>
    tpu.vector_store %arg5[%c0_18, %c0_19], %25 {strides = array<i32>} : memref<128x128xbf16, #tpu.memory_space<vmem>>, vector<128x32xbf16>,
    %27 = arith.truncf %22 : vector<128x16xf32> to vector<128x16xbf16>
    %c0_20 = arith.constant 0 : index
    %c32 = arith.constant 32 : index
    %28 = vector.load %arg5[%c0_20, %c32] : memref<128x128xbf16, #tpu.memory_space<vmem>>, vector<128x16xbf16>
    tpu.vector_store %arg5[%c0_20, %c32], %27 {strides = array<i32>} : memref<128x128xbf16, #tpu.memory_space<vmem>>, vector<128x16xbf16>,
    return
  }
}

</mosaic_0001>

<llo_original>
// kernel: tpu_custom_call.1
$region0: #{tpu_custom_call.1}
  #allocation0 [shape = 'u32[]', space=smem, size = 0x4, offset = 0x4, fixed_abs, tag = 'smem constant byte address 0x4 - core index']
  #allocation1 [shape = 'u32[144,128]{1,0:T(1,128)}', space=vmem, size = 0x12000, scoped, tag = 'internal scratch']
  %s0 = inlined_call_operand.vmem [shape: f32[128,32], index: 0, kind: input, shape index: {}]
  %s1 = inlined_call_operand.vmem [shape: f32[128,128], index: 1, kind: input, shape index: {}]
  %s2 = inlined_call_operand.vmem [shape: bf16[32,32], index: 2, kind: input, shape index: {}]
  %s3 = inlined_call_operand.vmem [shape: bf16[32,32], index: 3, kind: input, shape index: {}]
  %s4 = inlined_call_operand.vmem [shape: f32[128,16], index: 4, kind: input, shape index: {}]
  %s5 = inlined_call_operand.hbm [shape: bf16[128,128], index: 5, kind: output, shape index: {}]
  %s6 = sld [smem:[#allocation0]]
  $region30: #{tpu_custom_call.1} parent=0
    _
  %s8 = ssub.s32 1, %s6
  %s9 = scalar_select 0, %s8, %s6
  $region1: #{tpu_custom_call.1} parent=0
    #allocation2 [shape = 'u8[32768]{0}', space=vmem, size = 0x8000, scoped, tag = 'output window, operand 0, single buffered']
    #allocation3 [shape = 's32[1]{0}', space=sflag, size = 0x4, scoped, tag = 'scoped memory for tpu_custom_call.1']
    %10 = vsyncpa [#allocation3], 0
    // Predicated region
    $region2: #{tpu_custom_call.1} parent=1 // pred_check
      _
    $region3: #{tpu_custom_call.1} parent=1 // pred_check_branch
      %12 = sbr.rel (0) target = $region5
    $region4: #{tpu_custom_call.1} parent=1 // pred_region
      _
    $region5: #{tpu_custom_call.1} parent=1 // pred_fallthru
      _
    // Predicated region
    $region6: #{tpu_custom_call.1} parent=1 // pred_check
      _
    $region7: #{tpu_custom_call.1} parent=1 // pred_check_branch
      %14 = sbr.rel (0) target = $region9
    $region8: #{tpu_custom_call.1} parent=1 // pred_region
      _
    $region9: #{tpu_custom_call.1} parent=1 // pred_fallthru
      _
    // Predicated region
    $region10: #{tpu_custom_call.1} parent=1 // pred_check
      _
    $region11: #{tpu_custom_call.1} parent=1 // pred_check_branch
      %16 = sbr.rel (0) target = $region13
    $region12: #{tpu_custom_call.1} parent=1 // pred_region
      _
    $region13: #{tpu_custom_call.1} parent=1 // pred_fallthru
      _
    // Predicated region
    $region14: #{tpu_custom_call.1} parent=1 // pred_check
      _
    $region15: #{tpu_custom_call.1} parent=1 // pred_check_branch
      %18 = sbr.rel (0) target = $region17
    $region16: #{tpu_custom_call.1} parent=1 // pred_region
      _
    $region17: #{tpu_custom_call.1} parent=1 // pred_fallthru
      _
    // Predicated region
    $region18: #{tpu_custom_call.1} parent=1 // pred_check
      _
    $region19: #{tpu_custom_call.1} parent=1 // pred_check_branch
      %20 = sbr.rel (0) target = $region21
    $region20: #{tpu_custom_call.1} parent=1 // pred_region
      _
    $region21: #{tpu_custom_call.1} parent=1 // pred_fallthru
      _
    %v22 = vld [vmem:[%s0] sm:$0xff]
    %v23 = vld [vmem:[%s0 + $0x8] sm:$0xff]
    %v24 = vld [vmem:[%s0 + $0x10] sm:$0xff]
    %v25 = vld [vmem:[%s0 + $0x18] sm:$0xff]
    %v26 = vld [vmem:[%s0 + $0x20] sm:$0xff]
    %v27 = vld [vmem:[%s0 + $0x28] sm:$0xff]
    %v28 = vld [vmem:[%s0 + $0x30] sm:$0xff]
    %v29 = vld [vmem:[%s0 + $0x38] sm:$0xff]
    %v30 = vld [vmem:[%s0 + $0x40] sm:$0xff]
    %v31 = vld [vmem:[%s0 + $0x48] sm:$0xff]
    %v32 = vld [vmem:[%s0 + $0x50] sm:$0xff]
    %v33 = vld [vmem:[%s0 + $0x58] sm:$0xff]
    %v34 = vld [vmem:[%s0 + $0x60] sm:$0xff]
    %v35 = vld [vmem:[%s0 + $0x68] sm:$0xff]
    %v36 = vld [vmem:[%s0 + $0x70] sm:$0xff]
    %v37 = vld [vmem:[%s0 + $0x78] sm:$0xff]
    %v38 = vpack.c.bf16 %v23, %v22
    %v39 = vpack.c.bf16 %v25, %v24
    %v40 = vpack.c.bf16 %v27, %v26
    %v41 = vpack.c.bf16 %v29, %v28
    %v42 = vpack.c.bf16 %v31, %v30
    %v43 = vpack.c.bf16 %v33, %v32
    %v44 = vpack.c.bf16 %v35, %v34
    %v45 = vpack.c.bf16 %v37, %v36
    %v46 = vld [vmem:[%s2] sm:$0xf]
    %v47 = vld [vmem:[%s2 + $0x4] sm:$0xf]
    %v48 = vld [vmem:[%s2 + $0x8] sm:$0xf]
    %v49 = vld [vmem:[%s2 + $0xc] sm:$0xf]
    %v54 = vunpack.c.l.b16 %v46
    %v55 = vunpack.c.l.b16 %v47
    %v56 = vunpack.c.l.b16 %v48
    %v57 = vunpack.c.l.b16 %v49
    %v58 = vpack.c.b16 %v55, %v54
    %v59 = vpack.c.b16 %v57, %v56
    %vm62 = vcmask 261120
    %v64 = vsel %vm62, %v38, 0
    %v67 = vsel %vm62, %v39, 0
    %v70 = vsel %vm62, %v40, 0
    %v73 = vsel %vm62, %v41, 0
    %v76 = vsel %vm62, %v42, 0
    %v79 = vsel %vm62, %v43, 0
    %v82 = vsel %vm62, %v44, 0
    %v85 = vsel %vm62, %v45, 0
    %87 = vmatprep.subr.bf16.mxu0 0
    %88 = vmatpush1.bf16.msra.mxu0 %v58
    %89 = vmatprep.subr.bf16.mxu0 0
    %90 = vmatpush1.bf16.msra.mxu0 %v59
    %91 = vmatprep.subr.bf16.mxu0 0
    %92 = vmatpush1.bf16.msra.mxu0 0
    %93 = vmatprep.subr.bf16.mxu0 0
    %94 = vmatpush1.bf16.msra.mxu0 0
    %95 = vmatprep.subr.bf16.mxu0 0
    %96 = vmatpush1.bf16.msra.mxu0 0
    %97 = vmatprep.subr.bf16.mxu0 0
    %98 = vmatpush1.bf16.msra.mxu0 0
    %99 = vmatprep.subr.bf16.mxu0 0
    %100 = vmatpush1.bf16.msra.mxu0 0
    %101 = vmatprep.subr.bf16.mxu0 0
    %102 = vmatpush1.bf16.msra.mxu0 0
    %103 = vmatprep.subr.bf16.mxu0 0
    %104 = vmatpush1.bf16.msra.mxu0 0
    %105 = vmatprep.subr.bf16.mxu0 0
    %106 = vmatpush1.bf16.msra.mxu0 0
    %107 = vmatprep.subr.bf16.mxu0 0
    %108 = vmatpush1.bf16.msra.mxu0 0
    %109 = vmatprep.subr.bf16.mxu0 0
    %110 = vmatpush1.bf16.msra.mxu0 0
    %111 = vmatprep.subr.bf16.mxu0 0
    %112 = vmatpush1.bf16.msra.mxu0 0
    %113 = vmatprep.subr.bf16.mxu0 0
    %114 = vmatpush1.bf16.msra.mxu0 0
    %115 = vmatprep.subr.bf16.mxu0 0
    %116 = vmatpush1.bf16.msra.mxu0 0
    %117 = vmatprep.subr.bf16.mxu0 0
    %118 = vmatpush1.bf16.msra.mxu0 0
    %119 = vmatprep.mubr.bf16.mxu0 0
    %120 = vmatmul.mubr.bf16.gmra.mrb[0].mxu0 %v64
    %v121 = vpop.f32.mrb[0].mxu0
    %v122 = vadd.f32 0.0, %v121
    %v123 = vpop.f32.mrb[0].mxu0
    %v124 = vpop.f32.mrb[0].mxu0
    %v125 = vadd.f32 0.0, %v124
    %v126 = vpop.f32.mrb[0].mxu0
    %127 = vmatprep.mubr.bf16.mxu0 0
    %128 = vmatmul.mubr.bf16.gmra.mrb[0].mxu0 %v67
    %v129 = vpop.f32.mrb[0].mxu0
    %v130 = vadd.f32 0.0, %v129
    %v131 = vpop.f32.mrb[0].mxu0
    %v132 = vpop.f32.mrb[0].mxu0
    %v133 = vadd.f32 0.0, %v132
    %v134 = vpop.f32.mrb[0].mxu0
    %135 = vmatprep.mubr.bf16.mxu0 0
    %136 = vmatmul.mubr.bf16.gmra.mrb[0].mxu0 %v70
    %v137 = vpop.f32.mrb[0].mxu0
    %v138 = vadd.f32 0.0, %v137
    %v139 = vpop.f32.mrb[0].mxu0
    %v140 = vpop.f32.mrb[0].mxu0
    %v141 = vadd.f32 0.0, %v140
    %v142 = vpop.f32.mrb[0].mxu0
    %143 = vmatprep.mubr.bf16.mxu0 0
    %144 = vmatmul.mubr.bf16.gmra.mrb[0].mxu0 %v73
    %v145 = vpop.f32.mrb[0].mxu0
    %v146 = vadd.f32 0.0, %v145
    %v147 = vpop.f32.mrb[0].mxu0
    %v148 = vpop.f32.mrb[0].mxu0
    %v149 = vadd.f32 0.0, %v148
    %v150 = vpop.f32.mrb[0].mxu0
    %151 = vmatprep.mubr.bf16.mxu0 0
    %152 = vmatmul.mubr.bf16.gmra.mrb[0].mxu0 %v76
    %v153 = vpop.f32.mrb[0].mxu0
    %v154 = vadd.f32 0.0, %v153
    %v155 = vpop.f32.mrb[0].mxu0
    %v156 = vpop.f32.mrb[0].mxu0
    %v157 = vadd.f32 0.0, %v156
    %v158 = vpop.f32.mrb[0].mxu0
    %159 = vmatprep.mubr.bf16.mxu0 0
    %160 = vmatmul.mubr.bf16.gmra.mrb[0].mxu0 %v79
    %v161 = vpop.f32.mrb[0].mxu0
    %v162 = vadd.f32 0.0, %v161
    %v163 = vpop.f32.mrb[0].mxu0
    %v164 = vpop.f32.mrb[0].mxu0
    %v165 = vadd.f32 0.0, %v164
    %v166 = vpop.f32.mrb[0].mxu0
    %167 = vmatprep.mubr.bf16.mxu0 0
    %168 = vmatmul.mubr.bf16.gmra.mrb[0].mxu0 %v82
    %v169 = vpop.f32.mrb[0].mxu0
    %v170 = vadd.f32 0.0, %v169
    %v171 = vpop.f32.mrb[0].mxu0
    %v172 = vpop.f32.mrb[0].mxu0
    %v173 = vadd.f32 0.0, %v172
    %v174 = vpop.f32.mrb[0].mxu0
    %175 = vmatprep.mubr.bf16.mxu0 0
    %176 = vmatmul.mubr.bf16.gmra.mrb[0].mxu0 %v85
    %v177 = vpop.f32.mrb[0].mxu0
    %v178 = vadd.f32 0.0, %v177
    %v179 = vpop.f32.mrb[0].mxu0
    %v180 = vpop.f32.mrb[0].mxu0
    %v181 = vadd.f32 0.0, %v180
    %v182 = vpop.f32.mrb[0].mxu0
    %183 = vdwg.mxu0
    %v184 = vld [vmem:[%s1] sm:$0xff]
    %v185 = vld [vmem:[%s1 + $0x8] sm:$0xff]
    %v186 = vld [vmem:[%s1 + $0x10] sm:$0xff]
    %v187 = vld [vmem:[%s1 + $0x18] sm:$0xff]
    %v188 = vld [vmem:[%s1 + $0x20] sm:$0xff]
    %v189 = vld [vmem:[%s1 + $0x28] sm:$0xff]
    %v190 = vld [vmem:[%s1 + $0x30] sm:$0xff]
    %v191 = vld [vmem:[%s1 + $0x38] sm:$0xff]
    %v192 = vld [vmem:[%s1 + $0x40] sm:$0xff]
    %v193 = vld [vmem:[%s1 + $0x48] sm:$0xff]
    %v194 = vld [vmem:[%s1 + $0x50] sm:$0xff]
    %v195 = vld [vmem:[%s1 + $0x58] sm:$0xff]
    %v196 = vld [vmem:[%s1 + $0x60] sm:$0xff]
    %v197 = vld [vmem:[%s1 + $0x68] sm:$0xff]
    %v198 = vld [vmem:[%s1 + $0x70] sm:$0xff]
    %v199 = vld [vmem:[%s1 + $0x78] sm:$0xff]
    %v200 = vpack.c.bf16 %v185, %v184
    %v201 = vpack.c.bf16 %v187, %v186
    %v202 = vpack.c.bf16 %v189, %v188
    %v203 = vpack.c.bf16 %v191, %v190
    %v204 = vpack.c.bf16 %v193, %v192
    %v205 = vpack.c.bf16 %v195, %v194
    %v206 = vpack.c.bf16 %v197, %v196
    %v207 = vpack.c.bf16 %v199, %v198
    %v208 = vpack.c.bf16 %v125, %v122
    %v209 = vpack.c.bf16 %v133, %v130
    %v210 = vpack.c.bf16 %v141, %v138
    %v211 = vpack.c.bf16 %v149, %v146
    %v212 = vpack.c.bf16 %v157, %v154
    %v213 = vpack.c.bf16 %v165, %v162
    %v214 = vpack.c.bf16 %v173, %v170
    %v215 = vpack.c.bf16 %v181, %v178
    %216 = vmatprep.subr.bf16.mxu0 0
    %217 = vmatpush1.bf16.msra.mxu0 %v208
    %218 = vmatprep.subr.bf16.mxu0 0
    %219 = vmatpush1.bf16.msra.mxu0 %v209
    %220 = vmatprep.subr.bf16.mxu0 0
    %221 = vmatpush1.bf16.msra.mxu0 %v210
    %222 = vmatprep.subr.bf16.mxu0 0
    %223 = vmatpush1.bf16.msra.mxu0 %v211
    %224 = vmatprep.subr.bf16.mxu0 0
    %225 = vmatpush1.bf16.msra.mxu0 %v212
    %226 = vmatprep.subr.bf16.mxu0 0
    %227 = vmatpush1.bf16.msra.mxu0 %v213
    %228 = vmatprep.subr.bf16.mxu0 0
    %229 = vmatpush1.bf16.msra.mxu0 %v214
    %230 = vmatprep.subr.bf16.mxu0 0
    %231 = vmatpush1.bf16.msra.mxu0 %v215
    %232 = vmatprep.subr.bf16.mxu0 0
    %233 = vmatpush1.bf16.msra.mxu0 0
    %234 = vmatprep.subr.bf16.mxu0 0
    %235 = vmatpush1.bf16.msra.mxu0 0
    %236 = vmatprep.subr.bf16.mxu0 0
    %237 = vmatpush1.bf16.msra.mxu0 0
    %238 = vmatprep.subr.bf16.mxu0 0
    %239 = vmatpush1.bf16.msra.mxu0 0
    %240 = vmatprep.subr.bf16.mxu0 0
    %241 = vmatpush1.bf16.msra.mxu0 0
    %242 = vmatprep.subr.bf16.mxu0 0
    %243 = vmatpush1.bf16.msra.mxu0 0
    %244 = vmatprep.subr.bf16.mxu0 0
    %245 = vmatpush1.bf16.msra.mxu0 0
    %246 = vmatprep.subr.bf16.mxu0 0
    %247 = vmatpush1.bf16.msra.mxu0 0
    %248 = vmatprep.mubr.bf16.mxu0 0
    %249 = vmatmul.mubr.bf16.gmra.mrb[0].mxu0 %v200
    %v250 = vpop.f32.mrb[0].mxu0
    %v251 = vadd.f32 0.0, %v250
    %v252 = vpop.f32.mrb[0].mxu0
    %v253 = vpop.f32.mrb[0].mxu0
    %v254 = vadd.f32 0.0, %v253
    %v255 = vpop.f32.mrb[0].mxu0
    %256 = vmatprep.mubr.bf16.mxu0 0
    %257 = vmatmul.mubr.bf16.gmra.mrb[0].mxu0 %v201
    %v258 = vpop.f32.mrb[0].mxu0
    %v259 = vadd.f32 0.0, %v258
    %v260 = vpop.f32.mrb[0].mxu0
    %v261 = vpop.f32.mrb[0].mxu0
    %v262 = vadd.f32 0.0, %v261
    %v263 = vpop.f32.mrb[0].mxu0
    %264 = vmatprep.mubr.bf16.mxu0 0
    %265 = vmatmul.mubr.bf16.gmra.mrb[0].mxu0 %v202
    %v266 = vpop.f32.mrb[0].mxu0
    %v267 = vadd.f32 0.0, %v266
    %v268 = vpop.f32.mrb[0].mxu0
    %v269 = vpop.f32.mrb[0].mxu0
    %v270 = vadd.f32 0.0, %v269
    %v271 = vpop.f32.mrb[0].mxu0
    %272 = vmatprep.mubr.bf16.mxu0 0
    %273 = vmatmul.mubr.bf16.gmra.mrb[0].mxu0 %v203
    %v274 = vpop.f32.mrb[0].mxu0
    %v275 = vadd.f32 0.0, %v274
    %v276 = vpop.f32.mrb[0].mxu0
    %v277 = vpop.f32.mrb[0].mxu0
    %v278 = vadd.f32 0.0, %v277
    %v279 = vpop.f32.mrb[0].mxu0
    %280 = vmatprep.mubr.bf16.mxu0 0
    %281 = vmatmul.mubr.bf16.gmra.mrb[0].mxu0 %v204
    %v282 = vpop.f32.mrb[0].mxu0
    %v283 = vadd.f32 0.0, %v282
    %v284 = vpop.f32.mrb[0].mxu0
    %v285 = vpop.f32.mrb[0].mxu0
    %v286 = vadd.f32 0.0, %v285
    %v287 = vpop.f32.mrb[0].mxu0
    %288 = vmatprep.mubr.bf16.mxu0 0
    %289 = vmatmul.mubr.bf16.gmra.mrb[0].mxu0 %v205
    %v290 = vpop.f32.mrb[0].mxu0
    %v291 = vadd.f32 0.0, %v290
    %v292 = vpop.f32.mrb[0].mxu0
    %v293 = vpop.f32.mrb[0].mxu0
    %v294 = vadd.f32 0.0, %v293
    %v295 = vpop.f32.mrb[0].mxu0
    %296 = vmatprep.mubr.bf16.mxu0 0
    %297 = vmatmul.mubr.bf16.gmra.mrb[0].mxu0 %v206
    %v298 = vpop.f32.mrb[0].mxu0
    %v299 = vadd.f32 0.0, %v298
    %v300 = vpop.f32.mrb[0].mxu0
    %v301 = vpop.f32.mrb[0].mxu0
    %v302 = vadd.f32 0.0, %v301
    %v303 = vpop.f32.mrb[0].mxu0
    %304 = vmatprep.mubr.bf16.mxu0 0
    %305 = vmatmul.mubr.bf16.gmra.mrb[0].mxu0 %v207
    %v306 = vpop.f32.mrb[0].mxu0
    %v307 = vadd.f32 0.0, %v306
    %v308 = vpop.f32.mrb[0].mxu0
    %v309 = vpop.f32.mrb[0].mxu0
    %v310 = vadd.f32 0.0, %v309
    %v311 = vpop.f32.mrb[0].mxu0
    %312 = vdwg.mxu0
    %v313 = vmax.f32 %v251, 0.0
    %v314 = vmax.f32 %v254, 0.0
    %v315 = vmax.f32 %v259, 0.0
    %v316 = vmax.f32 %v262, 0.0
    %v317 = vmax.f32 %v267, 0.0
    %v318 = vmax.f32 %v270, 0.0
    %v319 = vmax.f32 %v275, 0.0
    %v320 = vmax.f32 %v278, 0.0
    %v321 = vmax.f32 %v283, 0.0
    %v322 = vmax.f32 %v286, 0.0
    %v323 = vmax.f32 %v291, 0.0
    %v324 = vmax.f32 %v294, 0.0
    %v325 = vmax.f32 %v299, 0.0
    %v326 = vmax.f32 %v302, 0.0
    %v327 = vmax.f32 %v307, 0.0
    %v328 = vmax.f32 %v310, 0.0
    %v329 = vpack.c.bf16 %v314, %v313
    %v330 = vpack.c.bf16 %v316, %v315
    %v331 = vpack.c.bf16 %v318, %v317
    %v332 = vpack.c.bf16 %v320, %v319
    %v333 = vpack.c.bf16 %v322, %v321
    %v334 = vpack.c.bf16 %v324, %v323
    %v335 = vpack.c.bf16 %v326, %v325
    %v336 = vpack.c.bf16 %v328, %v327
    %v337 = vld [vmem:[%s3] sm:$0xf]
    %v338 = vld [vmem:[%s3 + $0x4] sm:$0xf]
    %v339 = vld [vmem:[%s3 + $0x8] sm:$0xf]
    %v340 = vld [vmem:[%s3 + $0xc] sm:$0xf]
    %v345 = vunpack.c.l.b16 %v337
    %v346 = vunpack.c.l.b16 %v338
    %v347 = vunpack.c.l.b16 %v339
    %v348 = vunpack.c.l.b16 %v340
    %v349 = vpack.c.b16 %v346, %v345
    %v350 = vpack.c.b16 %v348, %v347
    %v354 = vsel %vm62, %v329, 0
    %v357 = vsel %vm62, %v330, 0
    %v360 = vsel %vm62, %v331, 0
    %v363 = vsel %vm62, %v332, 0
    %v366 = vsel %vm62, %v333, 0
    %v369 = vsel %vm62, %v334, 0
    %v372 = vsel %vm62, %v335, 0
    %v375 = vsel %vm62, %v336, 0
    %377 = vmatprep.subr.bf16.mxu0 0
    %378 = vmatpush1.bf16.msra.mxu0 %v349
    %379 = vmatprep.subr.bf16.mxu0 0
    %380 = vmatpush1.bf16.msra.mxu0 %v350
    %381 = vmatprep.subr.bf16.mxu0 0
    %382 = vmatpush1.bf16.msra.mxu0 0
    %383 = vmatprep.subr.bf16.mxu0 0
    %384 = vmatpush1.bf16.msra.mxu0 0
    %385 = vmatprep.subr.bf16.mxu0 0
    %386 = vmatpush1.bf16.msra.mxu0 0
    %387 = vmatprep.subr.bf16.mxu0 0
    %388 = vmatpush1.bf16.msra.mxu0 0
    %389 = vmatprep.subr.bf16.mxu0 0
    %390 = vmatpush1.bf16.msra.mxu0 0
    %391 = vmatprep.subr.bf16.mxu0 0
    %392 = vmatpush1.bf16.msra.mxu0 0
    %393 = vmatprep.subr.bf16.mxu0 0
    %394 = vmatpush1.bf16.msra.mxu0 0
    %395 = vmatprep.subr.bf16.mxu0 0
    %396 = vmatpush1.bf16.msra.mxu0 0
    %397 = vmatprep.subr.bf16.mxu0 0
    %398 = vmatpush1.bf16.msra.mxu0 0
    %399 = vmatprep.subr.bf16.mxu0 0
    %400 = vmatpush1.bf16.msra.mxu0 0
    %401 = vmatprep.subr.bf16.mxu0 0
    %402 = vmatpush1.bf16.msra.mxu0 0
    %403 = vmatprep.subr.bf16.mxu0 0
    %404 = vmatpush1.bf16.msra.mxu0 0
    %405 = vmatprep.subr.bf16.mxu0 0
    %406 = vmatpush1.bf16.msra.mxu0 0
    %407 = vmatprep.subr.bf16.mxu0 0
    %408 = vmatpush1.bf16.msra.mxu0 0
    %409 = vmatprep.mubr.bf16.mxu0 0
    %410 = vmatmul.mubr.bf16.gmra.mrb[0].mxu0 %v354
    %v411 = vpop.f32.mrb[0].mxu0
    %v412 = vadd.f32 0.0, %v411
    %v413 = vpop.f32.mrb[0].mxu0
    %v414 = vpop.f32.mrb[0].mxu0
    %v415 = vadd.f32 0.0, %v414
    %v416 = vpop.f32.mrb[0].mxu0
    %417 = vmatprep.mubr.bf16.mxu0 0
    %418 = vmatmul.mubr.bf16.gmra.mrb[0].mxu0 %v357
    %v419 = vpop.f32.mrb[0].mxu0
    %v420 = vadd.f32 0.0, %v419
    %v421 = vpop.f32.mrb[0].mxu0
    %v422 = vpop.f32.mrb[0].mxu0
    %v423 = vadd.f32 0.0, %v422
    %v424 = vpop.f32.mrb[0].mxu0
    %425 = vmatprep.mubr.bf16.mxu0 0
    %426 = vmatmul.mubr.bf16.gmra.mrb[0].mxu0 %v360
    %v427 = vpop.f32.mrb[0].mxu0
    %v428 = vadd.f32 0.0, %v427
    %v429 = vpop.f32.mrb[0].mxu0
    %v430 = vpop.f32.mrb[0].mxu0
    %v431 = vadd.f32 0.0, %v430
    %v432 = vpop.f32.mrb[0].mxu0
    %433 = vmatprep.mubr.bf16.mxu0 0
    %434 = vmatmul.mubr.bf16.gmra.mrb[0].mxu0 %v363
    %v435 = vpop.f32.mrb[0].mxu0
    %v436 = vadd.f32 0.0, %v435
    %v437 = vpop.f32.mrb[0].mxu0
    %v438 = vpop.f32.mrb[0].mxu0
    %v439 = vadd.f32 0.0, %v438
    %v440 = vpop.f32.mrb[0].mxu0
    %441 = vmatprep.mubr.bf16.mxu0 0
    %442 = vmatmul.mubr.bf16.gmra.mrb[0].mxu0 %v366
    %v443 = vpop.f32.mrb[0].mxu0
    %v444 = vadd.f32 0.0, %v443
    %v445 = vpop.f32.mrb[0].mxu0
    %v446 = vpop.f32.mrb[0].mxu0
    %v447 = vadd.f32 0.0, %v446
    %v448 = vpop.f32.mrb[0].mxu0
    %449 = vmatprep.mubr.bf16.mxu0 0
    %450 = vmatmul.mubr.bf16.gmra.mrb[0].mxu0 %v369
    %v451 = vpop.f32.mrb[0].mxu0
    %v452 = vadd.f32 0.0, %v451
    %v453 = vpop.f32.mrb[0].mxu0
    %v454 = vpop.f32.mrb[0].mxu0
    %v455 = vadd.f32 0.0, %v454
    %v456 = vpop.f32.mrb[0].mxu0
    %457 = vmatprep.mubr.bf16.mxu0 0
    %458 = vmatmul.mubr.bf16.gmra.mrb[0].mxu0 %v372
    %v459 = vpop.f32.mrb[0].mxu0
    %v460 = vadd.f32 0.0, %v459
    %v461 = vpop.f32.mrb[0].mxu0
    %v462 = vpop.f32.mrb[0].mxu0
    %v463 = vadd.f32 0.0, %v462
    %v464 = vpop.f32.mrb[0].mxu0
    %465 = vmatprep.mubr.bf16.mxu0 0
    %466 = vmatmul.mubr.bf16.gmra.mrb[0].mxu0 %v375
    %v467 = vpop.f32.mrb[0].mxu0
    %v468 = vadd.f32 0.0, %v467
    %v469 = vpop.f32.mrb[0].mxu0
    %v470 = vpop.f32.mrb[0].mxu0
    %v471 = vadd.f32 0.0, %v470
    %v472 = vpop.f32.mrb[0].mxu0
    %473 = vdwg.mxu0
    %v474 = vpack.c.bf16 %v415, %v412
    %v475 = vpack.c.bf16 %v423, %v420
    %v476 = vpack.c.bf16 %v431, %v428
    %v477 = vpack.c.bf16 %v439, %v436
    %v478 = vpack.c.bf16 %v447, %v444
    %v479 = vpack.c.bf16 %v455, %v452
    %v480 = vpack.c.bf16 %v463, %v460
    %v481 = vpack.c.bf16 %v471, %v468
    %482 = vmatprep.subr.bf16.mxu0 0
    %483 = vmatpush1.bf16.msra.mxu0 %v474
    %484 = vmatprep.subr.bf16.mxu0 0
    %485 = vmatpush1.bf16.msra.mxu0 %v475
    %486 = vmatprep.subr.bf16.mxu0 0
    %487 = vmatpush1.bf16.msra.mxu0 %v476
    %488 = vmatprep.subr.bf16.mxu0 0
    %489 = vmatpush1.bf16.msra.mxu0 %v477
    %490 = vmatprep.subr.bf16.mxu0 0
    %491 = vmatpush1.bf16.msra.mxu0 %v478
    %492 = vmatprep.subr.bf16.mxu0 0
    %493 = vmatpush1.bf16.msra.mxu0 %v479
    %494 = vmatprep.subr.bf16.mxu0 0
    %495 = vmatpush1.bf16.msra.mxu0 %v480
    %496 = vmatprep.subr.bf16.mxu0 0
    %497 = vmatpush1.bf16.msra.mxu0 %v481
    %498 = vmatprep.subr.bf16.mxu0 0
    %499 = vmatpush1.bf16.msra.mxu0 0
    %500 = vmatprep.subr.bf16.mxu0 0
    %501 = vmatpush1.bf16.msra.mxu0 0
    %502 = vmatprep.subr.bf16.mxu0 0
    %503 = vmatpush1.bf16.msra.mxu0 0
    %504 = vmatprep.subr.bf16.mxu0 0
    %505 = vmatpush1.bf16.msra.mxu0 0
    %506 = vmatprep.subr.bf16.mxu0 0
    %507 = vmatpush1.bf16.msra.mxu0 0
    %508 = vmatprep.subr.bf16.mxu0 0
    %509 = vmatpush1.bf16.msra.mxu0 0
    %510 = vmatprep.subr.bf16.mxu0 0
    %511 = vmatpush1.bf16.msra.mxu0 0
    %512 = vmatprep.subr.bf16.mxu0 0
    %513 = vmatpush1.bf16.msra.mxu0 0
    %514 = vmatprep.mubr.bf16.mxu0 0
    %515 = vmatmul.mubr.bf16.gmra.mrb[0].mxu0 %v200
    %v516 = vpop.f32.mrb[0].mxu0
    %v517 = vadd.f32 0.0, %v516
    %v518 = vpop.f32.mrb[0].mxu0
    %v519 = vpop.f32.mrb[0].mxu0
    %v520 = vadd.f32 0.0, %v519
    %v521 = vpop.f32.mrb[0].mxu0
    %522 = vmatprep.mubr.bf16.mxu0 0
    %523 = vmatmul.mubr.bf16.gmra.mrb[0].mxu0 %v201
    %v524 = vpop.f32.mrb[0].mxu0
    %v525 = vadd.f32 0.0, %v524
    %v526 = vpop.f32.mrb[0].mxu0
    %v527 = vpop.f32.mrb[0].mxu0
    %v528 = vadd.f32 0.0, %v527
    %v529 = vpop.f32.mrb[0].mxu0
    %530 = vmatprep.mubr.bf16.mxu0 0
    %531 = vmatmul.mubr.bf16.gmra.mrb[0].mxu0 %v202
    %v532 = vpop.f32.mrb[0].mxu0
    %v533 = vadd.f32 0.0, %v532
    %v534 = vpop.f32.mrb[0].mxu0
    %v535 = vpop.f32.mrb[0].mxu0
    %v536 = vadd.f32 0.0, %v535
    %v537 = vpop.f32.mrb[0].mxu0
    %538 = vmatprep.mubr.bf16.mxu0 0
    %539 = vmatmul.mubr.bf16.gmra.mrb[0].mxu0 %v203
    %v540 = vpop.f32.mrb[0].mxu0
    %v541 = vadd.f32 0.0, %v540
    %v542 = vpop.f32.mrb[0].mxu0
    %v543 = vpop.f32.mrb[0].mxu0
    %v544 = vadd.f32 0.0, %v543
    %v545 = vpop.f32.mrb[0].mxu0
    %546 = vmatprep.mubr.bf16.mxu0 0
    %547 = vmatmul.mubr.bf16.gmra.mrb[0].mxu0 %v204
    %v548 = vpop.f32.mrb[0].mxu0
    %v549 = vadd.f32 0.0, %v548
    %v550 = vpop.f32.mrb[0].mxu0
    %v551 = vpop.f32.mrb[0].mxu0
    %v552 = vadd.f32 0.0, %v551
    %v553 = vpop.f32.mrb[0].mxu0
    %554 = vmatprep.mubr.bf16.mxu0 0
    %555 = vmatmul.mubr.bf16.gmra.mrb[0].mxu0 %v205
    %v556 = vpop.f32.mrb[0].mxu0
    %v557 = vadd.f32 0.0, %v556
    %v558 = vpop.f32.mrb[0].mxu0
    %v559 = vpop.f32.mrb[0].mxu0
    %v560 = vadd.f32 0.0, %v559
    %v561 = vpop.f32.mrb[0].mxu0
    %562 = vmatprep.mubr.bf16.mxu0 0
    %563 = vmatmul.mubr.bf16.gmra.mrb[0].mxu0 %v206
    %v564 = vpop.f32.mrb[0].mxu0
    %v565 = vadd.f32 0.0, %v564
    %v566 = vpop.f32.mrb[0].mxu0
    %v567 = vpop.f32.mrb[0].mxu0
    %v568 = vadd.f32 0.0, %v567
    %v569 = vpop.f32.mrb[0].mxu0
    %570 = vmatprep.mubr.bf16.mxu0 0
    %571 = vmatmul.mubr.bf16.gmra.mrb[0].mxu0 %v207
    %v572 = vpop.f32.mrb[0].mxu0
    %v573 = vadd.f32 0.0, %v572
    %v574 = vpop.f32.mrb[0].mxu0
    %v575 = vpop.f32.mrb[0].mxu0
    %v576 = vadd.f32 0.0, %v575
    %v577 = vpop.f32.mrb[0].mxu0
    %578 = vdwg.mxu0
    %v579 = vld [vmem:[%s4] sm:$0xff]
    %v580 = vld [vmem:[%s4 + $0x8] sm:$0xff]
    %v581 = vld [vmem:[%s4 + $0x10] sm:$0xff]
    %v582 = vld [vmem:[%s4 + $0x18] sm:$0xff]
    %v583 = vld [vmem:[%s4 + $0x20] sm:$0xff]
    %v584 = vld [vmem:[%s4 + $0x28] sm:$0xff]
    %v585 = vld [vmem:[%s4 + $0x30] sm:$0xff]
    %v586 = vld [vmem:[%s4 + $0x38] sm:$0xff]
    %v587 = vld [vmem:[%s4 + $0x40] sm:$0xff]
    %v588 = vld [vmem:[%s4 + $0x48] sm:$0xff]
    %v589 = vld [vmem:[%s4 + $0x50] sm:$0xff]
    %v590 = vld [vmem:[%s4 + $0x58] sm:$0xff]
    %v591 = vld [vmem:[%s4 + $0x60] sm:$0xff]
    %v592 = vld [vmem:[%s4 + $0x68] sm:$0xff]
    %v593 = vld [vmem:[%s4 + $0x70] sm:$0xff]
    %v594 = vld [vmem:[%s4 + $0x78] sm:$0xff]
    %v595 = vmul.f32 %v517, 1.442695
    %v596 = vpow.pop %v595
    %v597 = vmul.f32 %v520, 1.442695
    %v598 = vpow.pop %v597
    %v599 = vmul.f32 %v525, 1.442695
    %v600 = vpow.pop %v599
    %v601 = vmul.f32 %v528, 1.442695
    %v602 = vpow.pop %v601
    %v603 = vmul.f32 %v533, 1.442695
    %v604 = vpow.pop %v603
    %v605 = vmul.f32 %v536, 1.442695
    %v606 = vpow.pop %v605
    %v607 = vmul.f32 %v541, 1.442695
    %v608 = vpow.pop %v607
    %v609 = vmul.f32 %v544, 1.442695
    %v610 = vpow.pop %v609
    %v611 = vmul.f32 %v549, 1.442695
    %v612 = vpow.pop %v611
    %v613 = vmul.f32 %v552, 1.442695
    %v614 = vpow.pop %v613
    %v615 = vmul.f32 %v557, 1.442695
    %v616 = vpow.pop %v615
    %v617 = vmul.f32 %v560, 1.442695
    %v618 = vpow.pop %v617
    %v619 = vmul.f32 %v565, 1.442695
    %v620 = vpow.pop %v619
    %v621 = vmul.f32 %v568, 1.442695
    %v622 = vpow.pop %v621
    %v623 = vmul.f32 %v573, 1.442695
    %v624 = vpow.pop %v623
    %v625 = vmul.f32 %v576, 1.442695
    %v626 = vpow.pop %v625
    %643 = vrot.lane.b32.xlu0 %v596, 112
    %v644 = vpop.permute.xlu0 %643
    %645 = vrot.lane.b32.xlu0 %v598, 112
    %v646 = vpop.permute.xlu0 %645
    %647 = vrot.lane.b32.xlu0 %v600, 112
    %v648 = vpop.permute.xlu0 %647
    %649 = vrot.lane.b32.xlu0 %v602, 112
    %v650 = vpop.permute.xlu0 %649
    %651 = vrot.lane.b32.xlu0 %v604, 112
    %v652 = vpop.permute.xlu0 %651
    %653 = vrot.lane.b32.xlu0 %v606, 112
    %v654 = vpop.permute.xlu0 %653
    %655 = vrot.lane.b32.xlu0 %v608, 112
    %v656 = vpop.permute.xlu0 %655
    %657 = vrot.lane.b32.xlu0 %v610, 112
    %v658 = vpop.permute.xlu0 %657
    %659 = vrot.lane.b32.xlu0 %v612, 112
    %v660 = vpop.permute.xlu0 %659
    %661 = vrot.lane.b32.xlu0 %v614, 112
    %v662 = vpop.permute.xlu0 %661
    %663 = vrot.lane.b32.xlu0 %v616, 112
    %v664 = vpop.permute.xlu0 %663
    %665 = vrot.lane.b32.xlu0 %v618, 112
    %v666 = vpop.permute.xlu0 %665
    %667 = vrot.lane.b32.xlu0 %v620, 112
    %v668 = vpop.permute.xlu0 %667
    %669 = vrot.lane.b32.xlu0 %v622, 112
    %v670 = vpop.permute.xlu0 %669
    %671 = vrot.lane.b32.xlu0 %v624, 112
    %v672 = vpop.permute.xlu0 %671
    %673 = vrot.lane.b32.xlu0 %v626, 112
    %v674 = vpop.permute.xlu0 %673
    %v691 = vmul.f32 %v579, %v644
    %v692 = vmul.f32 %v580, %v646
    %v693 = vmul.f32 %v581, %v648
    %v694 = vmul.f32 %v582, %v650
    %v695 = vmul.f32 %v583, %v652
    %v696 = vmul.f32 %v584, %v654
    %v697 = vmul.f32 %v585, %v656
    %v698 = vmul.f32 %v586, %v658
    %v699 = vmul.f32 %v587, %v660
    %v700 = vmul.f32 %v588, %v662
    %v701 = vmul.f32 %v589, %v664
    %v702 = vmul.f32 %v590, %v666
    %v703 = vmul.f32 %v591, %v668
    %v704 = vmul.f32 %v592, %v670
    %v705 = vmul.f32 %v593, %v672
    %v706 = vmul.f32 %v594, %v674
    %v707 = vadd.f32 %v691, %v517
    %v708 = vadd.f32 %v692, %v520
    %v709 = vadd.f32 %v693, %v525
    %v710 = vadd.f32 %v694, %v528
    %v711 = vadd.f32 %v695, %v533
    %v712 = vadd.f32 %v696, %v536
    %v713 = vadd.f32 %v697, %v541
    %v714 = vadd.f32 %v698, %v544
    %v715 = vadd.f32 %v699, %v549
    %v716 = vadd.f32 %v700, %v552
    %v717 = vadd.f32 %v701, %v557
    %v718 = vadd.f32 %v702, %v560
    %v719 = vadd.f32 %v703, %v565
    %v720 = vadd.f32 %v704, %v568
    %v721 = vadd.f32 %v705, %v573
    %v722 = vadd.f32 %v706, %v576
    %723 = vst [vmem:[#allocation2] sm:$0xf] 0
    %724 = vst [vmem:[#allocation2 + $0x4] sm:$0xf] 0
    %725 = vst [vmem:[#allocation2 + $0x8] sm:$0xf] 0
    %726 = vst [vmem:[#allocation2 + $0xc] sm:$0xf] 0
    %727 = vst [vmem:[#allocation2 + $0x10] sm:$0xf] 0
    %728 = vst [vmem:[#allocation2 + $0x14] sm:$0xf] 0
    %729 = vst [vmem:[#allocation2 + $0x18] sm:$0xf] 0
    %730 = vst [vmem:[#allocation2 + $0x1c] sm:$0xf] 0
    %731 = vst [vmem:[#allocation2 + $0x20] sm:$0xf] 0
    %732 = vst [vmem:[#allocation2 + $0x24] sm:$0xf] 0
    %733 = vst [vmem:[#allocation2 + $0x28] sm:$0xf] 0
    %734 = vst [vmem:[#allocation2 + $0x2c] sm:$0xf] 0
    %735 = vst [vmem:[#allocation2 + $0x30] sm:$0xf] 0
    %736 = vst [vmem:[#allocation2 + $0x34] sm:$0xf] 0
    %737 = vst [vmem:[#allocation2 + $0x38] sm:$0xf] 0
    %738 = vst [vmem:[#allocation2 + $0x3c] sm:$0xf] 0
    %v739 = vpack.c.bf16 %v520, %v517
    %v740 = vpack.c.bf16 %v528, %v525
    %v741 = vpack.c.bf16 %v536, %v533
    %v742 = vpack.c.bf16 %v544, %v541
    %v743 = vpack.c.bf16 %v552, %v549
    %v744 = vpack.c.bf16 %v560, %v557
    %v745 = vpack.c.bf16 %v568, %v565
    %v746 = vpack.c.bf16 %v576, %v573
    %v755 = vunpack.c.l.b16 %v739
    %v756 = vunpack.c.h.b16 %v739
    %v757 = vunpack.c.l.b16 %v740
    %v758 = vunpack.c.h.b16 %v740
    %v759 = vunpack.c.l.b16 %v741
    %v760 = vunpack.c.h.b16 %v741
    %v761 = vunpack.c.l.b16 %v742
    %v762 = vunpack.c.h.b16 %v742
    %v763 = vunpack.c.l.b16 %v743
    %v764 = vunpack.c.h.b16 %v743
    %v765 = vunpack.c.l.b16 %v744
    %v766 = vunpack.c.h.b16 %v744
    %v767 = vunpack.c.l.b16 %v745
    %v768 = vunpack.c.h.b16 %v745
    %v769 = vunpack.c.l.b16 %v746
    %v770 = vunpack.c.h.b16 %v746
    %v771 = vpack.c.b16 %v755, %v755
    %v772 = vpack.c.b16 %v756, %v756
    %v773 = vpack.c.b16 %v757, %v757
    %v774 = vpack.c.b16 %v758, %v758
    %v775 = vpack.c.b16 %v759, %v759
    %v776 = vpack.c.b16 %v760, %v760
    %v777 = vpack.c.b16 %v761, %v761
    %v778 = vpack.c.b16 %v762, %v762
    %v779 = vpack.c.b16 %v763, %v763
    %v780 = vpack.c.b16 %v764, %v764
    %v781 = vpack.c.b16 %v765, %v765
    %v782 = vpack.c.b16 %v766, %v766
    %v783 = vpack.c.b16 %v767, %v767
    %v784 = vpack.c.b16 %v768, %v768
    %v785 = vpack.c.b16 %v769, %v769
    %v786 = vpack.c.b16 %v770, %v770
    %vm803 = vcmask 257024
    %804 = vst.msk [vmem:[#allocation2] sm:$0xf] %vm803, %v771
    %805 = vst.msk [vmem:[#allocation2 + $0x4] sm:$0xf] %vm803, %v772
    %806 = vst.msk [vmem:[#allocation2 + $0x8] sm:$0xf] %vm803, %v773
    %807 = vst.msk [vmem:[#allocation2 + $0xc] sm:$0xf] %vm803, %v774
    %808 = vst.msk [vmem:[#allocation2 + $0x10] sm:$0xf] %vm803, %v775
    %809 = vst.msk [vmem:[#allocation2 + $0x14] sm:$0xf] %vm803, %v776
    %810 = vst.msk [vmem:[#allocation2 + $0x18] sm:$0xf] %vm803, %v777
    %811 = vst.msk [vmem:[#allocation2 + $0x1c] sm:$0xf] %vm803, %v778
    %812 = vst.msk [vmem:[#allocation2 + $0x20] sm:$0xf] %vm803, %v779
    %813 = vst.msk [vmem:[#allocation2 + $0x24] sm:$0xf] %vm803, %v780
    %814 = vst.msk [vmem:[#allocation2 + $0x28] sm:$0xf] %vm803, %v781
    %815 = vst.msk [vmem:[#allocation2 + $0x2c] sm:$0xf] %vm803, %v782
    %816 = vst.msk [vmem:[#allocation2 + $0x30] sm:$0xf] %vm803, %v783
    %817 = vst.msk [vmem:[#allocation2 + $0x34] sm:$0xf] %vm803, %v784
    %818 = vst.msk [vmem:[#allocation2 + $0x38] sm:$0xf] %vm803, %v785
    %819 = vst.msk [vmem:[#allocation2 + $0x3c] sm:$0xf] %vm803, %v786
    %v820 = vpack.c.bf16 %v708, %v707
    %v821 = vpack.c.bf16 %v710, %v709
    %v822 = vpack.c.bf16 %v712, %v711
    %v823 = vpack.c.bf16 %v714, %v713
    %v824 = vpack.c.bf16 %v716, %v715
    %v825 = vpack.c.bf16 %v718, %v717
    %v826 = vpack.c.bf16 %v720, %v719
    %v827 = vpack.c.bf16 %v722, %v721
    %v836 = vunpack.c.l.b16 %v820
    %v837 = vunpack.c.h.b16 %v820
    %v838 = vunpack.c.l.b16 %v821
    %v839 = vunpack.c.h.b16 %v821
    %v840 = vunpack.c.l.b16 %v822
    %v841 = vunpack.c.h.b16 %v822
    %v842 = vunpack.c.l.b16 %v823
    %v843 = vunpack.c.h.b16 %v823
    %v844 = vunpack.c.l.b16 %v824
    %v845 = vunpack.c.h.b16 %v824
    %v846 = vunpack.c.l.b16 %v825
    %v847 = vunpack.c.h.b16 %v825
    %v848 = vunpack.c.l.b16 %v826
    %v849 = vunpack.c.h.b16 %v826
    %v850 = vunpack.c.l.b16 %v827
    %v851 = vunpack.c.h.b16 %v827
    %v852 = vpack.c.b16 %v836, %v836
    %v853 = vpack.c.b16 %v837, %v837
    %v854 = vpack.c.b16 %v838, %v838
    %v855 = vpack.c.b16 %v839, %v839
    %v856 = vpack.c.b16 %v840, %v840
    %v857 = vpack.c.b16 %v841, %v841
    %v858 = vpack.c.b16 %v842, %v842
    %v859 = vpack.c.b16 %v843, %v843
    %v860 = vpack.c.b16 %v844, %v844
    %v861 = vpack.c.b16 %v845, %v845
    %v862 = vpack.c.b16 %v846, %v846
    %v863 = vpack.c.b16 %v847, %v847
    %v864 = vpack.c.b16 %v848, %v848
    %v865 = vpack.c.b16 %v849, %v849
    %v866 = vpack.c.b16 %v850, %v850
    %v867 = vpack.c.b16 %v851, %v851
    %868 = vrot.lane.b32.xlu0 %v852, 32
    %v869 = vpop.permute.xlu0 %868
    %870 = vrot.lane.b32.xlu0 %v853, 32
    %v871 = vpop.permute.xlu0 %870
    %872 = vrot.lane.b32.xlu0 %v854, 32
    %v873 = vpop.permute.xlu0 %872
    %874 = vrot.lane.b32.xlu0 %v855, 32
    %v875 = vpop.permute.xlu0 %874
    %876 = vrot.lane.b32.xlu0 %v856, 32
    %v877 = vpop.permute.xlu0 %876
    %878 = vrot.lane.b32.xlu0 %v857, 32
    %v879 = vpop.permute.xlu0 %878
    %880 = vrot.lane.b32.xlu0 %v858, 32
    %v881 = vpop.permute.xlu0 %880
    %882 = vrot.lane.b32.xlu0 %v859, 32
    %v883 = vpop.permute.xlu0 %882
    %884 = vrot.lane.b32.xlu0 %v860, 32
    %v885 = vpop.permute.xlu0 %884
    %886 = vrot.lane.b32.xlu0 %v861, 32
    %v887 = vpop.permute.xlu0 %886
    %888 = vrot.lane.b32.xlu0 %v862, 32
    %v889 = vpop.permute.xlu0 %888
    %890 = vrot.lane.b32.xlu0 %v863, 32
    %v891 = vpop.permute.xlu0 %890
    %892 = vrot.lane.b32.xlu0 %v864, 32
    %v893 = vpop.permute.xlu0 %892
    %894 = vrot.lane.b32.xlu0 %v865, 32
    %v895 = vpop.permute.xlu0 %894
    %896 = vrot.lane.b32.xlu0 %v866, 32
    %v897 = vpop.permute.xlu0 %896
    %898 = vrot.lane.b32.xlu0 %v867, 32
    %v899 = vpop.permute.xlu0 %898
    %vm916 = vcmask 388352
    %917 = vst.msk [vmem:[#allocation2] sm:$0xf] %vm916, %v869
    %918 = vst.msk [vmem:[#allocation2 + $0x4] sm:$0xf] %vm916, %v871
    %919 = vst.msk [vmem:[#allocation2 + $0x8] sm:$0xf] %vm916, %v873
    %920 = vst.msk [vmem:[#allocation2 + $0xc] sm:$0xf] %vm916, %v875
    %921 = vst.msk [vmem:[#allocation2 + $0x10] sm:$0xf] %vm916, %v877
    %922 = vst.msk [vmem:[#allocation2 + $0x14] sm:$0xf] %vm916, %v879
    %923 = vst.msk [vmem:[#allocation2 + $0x18] sm:$0xf] %vm916, %v881
    %924 = vst.msk [vmem:[#allocation2 + $0x1c] sm:$0xf] %vm916, %v883
    %925 = vst.msk [vmem:[#allocation2 + $0x20] sm:$0xf] %vm916, %v885
    %926 = vst.msk [vmem:[#allocation2 + $0x24] sm:$0xf] %vm916, %v887
    %927 = vst.msk [vmem:[#allocation2 + $0x28] sm:$0xf] %vm916, %v889
    %928 = vst.msk [vmem:[#allocation2 + $0x2c] sm:$0xf] %vm916, %v891
    %929 = vst.msk [vmem:[#allocation2 + $0x30] sm:$0xf] %vm916, %v893
    %930 = vst.msk [vmem:[#allocation2 + $0x34] sm:$0xf] %vm916, %v895
    %931 = vst.msk [vmem:[#allocation2 + $0x38] sm:$0xf] %vm916, %v897
    %932 = vst.msk [vmem:[#allocation2 + $0x3c] sm:$0xf] %vm916, %v899
    // Predicated region
    $region22: #{tpu_custom_call.1} parent=1 // pred_check
      _
    $region23: #{tpu_custom_call.1} parent=1 // pred_check_branch
      %934 = sbr.rel (0) target = $region25
    $region24: #{tpu_custom_call.1} parent=1 // pred_region
      %s936 = ssub.s32 1024, 1024
      %937 = vsyncadd [#allocation3], %s936
      %s938 = sshll.u32 [#allocation2], 4
      %s939 = int_to_ptr.vmem [resolvable:$true] %s938
      %944 = dma.vmem_to_hbm [thread:$0]  %s939, 1024, %s5, [#allocation3], 64, 64, 4
    $region25: #{tpu_custom_call.1} parent=1 // pred_fallthru
      _
    // Predicated region
    $region26: #{tpu_custom_call.1} parent=1 // pred_check
      _
    $region27: #{tpu_custom_call.1} parent=1 // pred_check_branch
      %946 = sbr.rel (0) target = $region29
    $region28: #{tpu_custom_call.1} parent=1 // pred_region
      %947 = dma.done [#allocation3], 1024
    $region29: #{tpu_custom_call.1} parent=1 // pred_fallthru
      _
    %948 = vsyncpa [#allocation3], 1

</llo_original>
